<compile_context>
chip_gen: v6e
topology: v6e:2x2x1
jax: 0.10.0
libtpu: 0.0.40
codegen_flags: <defaults>
</compile_context>

<pallas_src>
import functools

import jax
import jax.numpy as jnp
from jax.experimental import pallas as pl
from jax.experimental.pallas import tpu as pltpu


def _round_up(x, m):
    return (x + m - 1) // m * m


def _cdiv(a, b):
    return (a + b - 1) // b


def classifier_kernel(h_ref, w1_ref, b1_ref, w2_ref, b2_ref, out_ref):
    # lin1 + relu   (dropout == identity on the eval/forward path)
    # TODO(synk): training-mode dropout (args.drop_rate) not applied; forward() is eval-path.
    h_bf = h_ref[...].astype(jnp.bfloat16)                        # (TM, D) bf16 (VPU pack)
    hidden_t = jnp.dot(w1_ref[...], h_bf.T,                       # (H, D) @ (D, TM) -> (H, TM) f32
                       preferred_element_type=jnp.float32) + b1_ref[...]
    hidden_t = jnp.maximum(hidden_t, 0.0)

    # lin2 (bf16 MXU inputs, f32 accumulation); tag dim padded to 8 sublanes.
    scores_t = jnp.dot(w2_ref[...], hidden_t.astype(jnp.bfloat16),
                       preferred_element_type=jnp.float32) + b2_ref[...]   # (Tp, TM) f32

    # argmax over the (padded) tag sublanes; log_softmax dropped (argmax-invariant).
    # Sublane reduction over just 8 rows; result is a lane-dense (1, TM) int32 store.
    t_pad = scores_t.shape[0]
    mx = jnp.max(scores_t, axis=0, keepdims=True)                 # (1, TM)
    idx = jax.lax.broadcasted_iota(jnp.int32, scores_t.shape, 0)  # (Tp, TM)
    cand = jnp.where(scores_t == mx, idx, t_pad)                  # first-index tie-break
    out_ref[...] = jnp.min(cand, axis=0, keepdims=True)           # (1, TM) int32


@functools.partial(jax.jit, static_argnames=("tm_max",))
def classifier_forward(h, w1_t, b1, w2_t, b2, *, tm_max=2048):
    """h: (N, input_dim) f32. w1_t: (input_dim, hidden). w2_t: (hidden, tag_size).
    Returns y_hat: (N,) int32."""
    N, D = h.shape
    H = w1_t.shape[1]
    T = w2_t.shape[1]

    lane = 128
    sub = 8
    t_pad = _round_up(T, sub)                       # 7 -> 8 sublanes (not 128 lanes)

    # Rows per grid step: always a multiple of 128 (legal, lane-dense output tile),
    # capped by tm_max, and capped at ~ceil(N/2) so the parallel grid axis splits
    # across both TensorCores on v7x whenever N is large enough.
    tm = _round_up(min(max(tm_max, lane), max(N, 1)), lane)
    if N > lane:
        tm = min(tm, _round_up(_cdiv(N, 2), lane))
    n_tiles = _cdiv(N, tm)
    n_pad = n_tiles * tm

    # Tiny weights/biases are reshaped/cast once here; h itself is streamed f32
    # and cast to bf16 inside the kernel.
    w1_hd = w1_t.T.astype(jnp.bfloat16)                                          # (H, D)
    b1_c = b1.reshape(H, 1).astype(jnp.float32)                                  # (H, 1)
    w2_th = jnp.zeros((t_pad, H), jnp.bfloat16).at[:T].set(w2_t.T.astype(jnp.bfloat16))
    # Pad tag rows get a huge negative bias so they can never win the argmax.
    b2_c = jnp.full((t_pad, 1), -1e30, jnp.float32).at[:T, 0].set(b2.astype(jnp.float32))

    out = pl.pallas_call(
        classifier_kernel,
        out_shape=jax.ShapeDtypeStruct((1, n_pad), jnp.int32),
        grid_spec=pltpu.PrefetchScalarGridSpec(
            num_scalar_prefetch=0,
            grid=(n_tiles,),
            in_specs=[
                pl.BlockSpec((tm, D), lambda i: (i, 0)),          # h: streamed f32 over N
                pl.BlockSpec((H, D), lambda i: (0, 0)),           # weights: resident in VMEM
                pl.BlockSpec((H, 1), lambda i: (0, 0)),
                pl.BlockSpec((t_pad, H), lambda i: (0, 0)),
                pl.BlockSpec((t_pad, 1), lambda i: (0, 0)),
            ],
            out_specs=pl.BlockSpec((1, tm), lambda i: (0, i)),    # lane-dense int32 output
        ),
        compiler_params=pltpu.CompilerParams(
            dimension_semantics=("parallel",)),
    )(h, w1_hd, b1_c, w2_th, b2_c)
    return out.reshape(n_pad)[:N]


def reference_forward(h, w1_t, b1, w2_t, b2):
    """Pure-JAX reference with the module's exact forward ops (log_softmax kept),
    using the same mixed precision as the kernel (bf16 MXU inputs, f32 accum)."""
    hidden = jnp.dot(h.astype(jnp.bfloat16), w1_t.astype(jnp.bfloat16),
                     preferred_element_type=jnp.float32) + b1
    hidden = jnp.maximum(hidden, 0.0)
    scores = jnp.dot(hidden.astype(jnp.bfloat16), w2_t.astype(jnp.bfloat16),
                     preferred_element_type=jnp.float32) + b2
    log_prob = jax.nn.log_softmax(scores, axis=-1)
    return jnp.argmax(log_prob, axis=-1).astype(jnp.int32)


if __name__ == "__main__":
    # Small, deterministic setup consistent with the module:
    # input_dim=32, hidden_size=32, tag_size=7 (7 emotion classes).
    key = jax.random.PRNGKey(0)
    input_dim, hidden_size, tag_size = 32, 32, 7

    k_h, k_w1, k_b1, k_w2, k_b2, k_h2 = jax.random.split(key, 6)
    # PyTorch Linear stores weight as (out, in); we pass the transposed (in, out) form.
    w1_t = jax.random.normal(k_w1, (input_dim, hidden_size), dtype=jnp.float32) * 0.1
    b1 = jax.random.normal(k_b1, (hidden_size,), dtype=jnp.float32) * 0.1
    w2_t = jax.random.normal(k_w2, (hidden_size, tag_size), dtype=jnp.float32) * 0.1
    b2 = jax.random.normal(k_b2, (tag_size,), dtype=jnp.float32) * 0.1

    # Case 1: tiny batch (single ragged tile).
    N1 = 8
    h1 = jax.random.normal(k_h, (N1, input_dim), dtype=jnp.float32)
    y1 = jax.block_until_ready(classifier_forward(h1, w1_t, b1, w2_t, b2))
    assert y1.shape == (N1,) and y1.dtype == jnp.int32
    assert bool(jnp.all(y1 == reference_forward(h1, w1_t, b1, w2_t, b2))), y1

    # Case 2: multi-tile batch (exercises the 2-way parallel grid + ragged last tile).
    N2 = 300
    h2 = jax.random.normal(k_h2, (N2, input_dim), dtype=jnp.float32)
    y2 = jax.block_until_ready(classifier_forward(h2, w1_t, b1, w2_t, b2))
    assert y2.shape == (N2,) and y2.dtype == jnp.int32
    assert bool(jnp.all(y2 == reference_forward(h2, w1_t, b1, w2_t, b2))), y2

    print("KERNEL_OK")
</pallas_src>

<mosaic_0001>
module attributes {stable_mosaic.version = 11 : i64} {
  func.func @classifier_kernel(%arg0: i32, %arg1: memref<128x32xf32, #tpu.memory_space<vmem>>, %arg2: memref<32x32xbf16, #tpu.memory_space<vmem>>, %arg3: memref<32x1xf32, #tpu.memory_space<vmem>>, %arg4: memref<8x32xbf16, #tpu.memory_space<vmem>>, %arg5: memref<8x1xf32, #tpu.memory_space<vmem>>, %arg6: memref<1x128xi32, #tpu.memory_space<vmem>>) attributes {dimension_semantics = [#tpu.dimension_semantics<parallel>], iteration_bounds = array<i64: 1>, scalar_prefetch = 0 : i64, scratch_operands = 0 : i64, tpu.core_type = #tpu.core_type<tc>, window_params = [{transform_indices = @transform_0, window_bounds = array<i64: 128, 32>}, {pipeline_mode = #tpu.pipeline_mode<synchronous>, transform_indices = @transform_1, window_bounds = array<i64: 32, 32>}, {pipeline_mode = #tpu.pipeline_mode<synchronous>, transform_indices = @transform_2, window_bounds = array<i64: 32, 1>}, {pipeline_mode = #tpu.pipeline_mode<synchronous>, transform_indices = @transform_3, window_bounds = array<i64: 8, 32>}, {pipeline_mode = #tpu.pipeline_mode<synchronous>, transform_indices = @transform_4, window_bounds = array<i64: 8, 1>}, {transform_indices = @transform_5, window_bounds = array<i64: 1, 128>}]} {
    %c0 = arith.constant 0 : index
    %c0_0 = arith.constant 0 : index
    %0 = vector.load %arg1[%c0, %c0_0] : memref<128x32xf32, #tpu.memory_space<vmem>>, vector<128x32xf32>
    %1 = arith.truncf %0 : vector<128x32xf32> to vector<128x32xbf16>
    %c0_1 = arith.constant 0 : index
    %c0_2 = arith.constant 0 : index
    %2 = vector.load %arg2[%c0_1, %c0_2] : memref<32x32xbf16, #tpu.memory_space<vmem>>, vector<32x32xbf16>
    %3 = tpu.transpose %1, [1, 0] : vector<128x32xbf16> -> vector<32x128xbf16>
    %cst = arith.constant dense<0.000000e+00> : vector<32x128xf32>
    %4 = tpu.matmul %2, %3, %cst {dimension_numbers = #tpu.dot_dimension_numbers<[1], [0], [0], [1], [0, 0, 1, 1], [], []>} : vector<32x32xbf16>, vector<32x128xbf16>, vector<32x128xf32> -> vector<32x128xf32>
    %c0_3 = arith.constant 0 : index
    %c0_4 = arith.constant 0 : index
    %5 = vector.load %arg3[%c0_3, %c0_4] : memref<32x1xf32, #tpu.memory_space<vmem>>, vector<32x1xf32>
    %6 = vector.broadcast %5 : vector<32x1xf32> to vector<32x128xf32>
    %7 = arith.addf %4, %6 : vector<32x128xf32>
    %cst_5 = arith.constant 0.000000e+00 : f32
    %8 = vector.broadcast %cst_5 : f32 to vector<32x128xf32>
    %9 = arith.maximumf %7, %8 : vector<32x128xf32>
    %c0_6 = arith.constant 0 : index
    %c0_7 = arith.constant 0 : index
    %10 = vector.load %arg4[%c0_6, %c0_7] : memref<8x32xbf16, #tpu.memory_space<vmem>>, vector<8x32xbf16>
    %11 = arith.truncf %9 : vector<32x128xf32> to vector<32x128xbf16>
    %cst_8 = arith.constant dense<0.000000e+00> : vector<8x128xf32>
    %12 = tpu.matmul %10, %11, %cst_8 {dimension_numbers = #tpu.dot_dimension_numbers<[1], [0], [0], [1], [0, 0, 1, 1], [], []>} : vector<8x32xbf16>, vector<32x128xbf16>, vector<8x128xf32> -> vector<8x128xf32>
    %c0_9 = arith.constant 0 : index
    %c0_10 = arith.constant 0 : index
    %13 = vector.load %arg5[%c0_9, %c0_10] : memref<8x1xf32, #tpu.memory_space<vmem>>, vector<8x1xf32>
    %14 = vector.broadcast %13 : vector<8x1xf32> to vector<8x128xf32>
    %15 = arith.addf %12, %14 : vector<8x128xf32>
    %cst_11 = arith.constant dense<0xFF800000> : vector<128xf32>
    %16 = vector.multi_reduction <maximumf>, %15, %cst_11 [0] : vector<8x128xf32> to vector<128xf32>
    %17 = vector.shape_cast %16 : vector<128xf32> to vector<1x128xf32>
    %18 = tpu.iota {dimensions = array<i32: 0>} : vector<8x128xi32>
    %19 = vector.broadcast %17 : vector<1x128xf32> to vector<8x128xf32>
    %20 = arith.cmpf oeq, %15, %19 : vector<8x128xf32>
    %c8_i32 = arith.constant 8 : i32
    %21 = vector.broadcast %c8_i32 : i32 to vector<8x128xi32>
    %22 = arith.select %20, %18, %21 : vector<8x128xi1>, vector<8x128xi32>
    %cst_12 = arith.constant dense<2147483647> : vector<128xi32>
    %23 = vector.multi_reduction <minsi>, %22, %cst_12 [0] : vector<8x128xi32> to vector<128xi32>
    %24 = vector.shape_cast %23 : vector<128xi32> to vector<1x128xi32>
    %c0_13 = arith.constant 0 : index
    %c0_14 = arith.constant 0 : index
    %25 = vector.load %arg6[%c0_13, %c0_14] : memref<1x128xi32, #tpu.memory_space<vmem>>, vector<1x128xi32>
    tpu.vector_store %arg6[%c0_13, %c0_14], %24 {strides = array<i32>} : memref<1x128xi32, #tpu.memory_space<vmem>>, vector<1x128xi32>,
    return
  }
  func.func @transform_0(%arg0: i32) -> (i32, i32) {
    %c0_i32 = arith.constant 0 : i32
    %c0_i32_0 = arith.constant 0 : i32
    return %arg0, %c0_i32 : i32, i32
  }
  func.func @transform_1(%arg0: i32) -> (i32, i32) {
    %c0_i32 = arith.constant 0 : i32
    %c0_i32_0 = arith.constant 0 : i32
    %c0_i32_1 = arith.constant 0 : i32
    return %c0_i32, %c0_i32_0 : i32, i32
  }
  func.func @transform_2(%arg0: i32) -> (i32, i32) {
    %c0_i32 = arith.constant 0 : i32
    %c0_i32_0 = arith.constant 0 : i32
    %c0_i32_1 = arith.constant 0 : i32
    return %c0_i32, %c0_i32_0 : i32, i32
  }
  func.func @transform_3(%arg0: i32) -> (i32, i32) {
    %c0_i32 = arith.constant 0 : i32
    %c0_i32_0 = arith.constant 0 : i32
    %c0_i32_1 = arith.constant 0 : i32
    return %c0_i32, %c0_i32_0 : i32, i32
  }
  func.func @transform_4(%arg0: i32) -> (i32, i32) {
    %c0_i32 = arith.constant 0 : i32
    %c0_i32_0 = arith.constant 0 : i32
    %c0_i32_1 = arith.constant 0 : i32
    return %c0_i32, %c0_i32_0 : i32, i32
  }
  func.func @transform_5(%arg0: i32) -> (i32, i32) {
    %c0_i32 = arith.constant 0 : i32
    %c0_i32_0 = arith.constant 0 : i32
    return %c0_i32, %arg0 : i32, i32
  }
}

</mosaic_0001>

<llo_original>
// kernel: classifier_forward.1
$region0: #{classifier_forward.1}
  #allocation0 [shape = 'u32[]', space=smem, size = 0x4, offset = 0x4, fixed_abs, tag = 'smem constant byte address 0x4 - core index']
  #allocation1 [shape = 'u32[144,128]{1,0:T(1,128)}', space=vmem, size = 0x12000, scoped, tag = 'internal scratch']
  %s0 = inlined_call_operand.vmem [shape: f32[8,32], index: 0, kind: input, shape index: {}]
  %s1 = inlined_call_operand.vmem [shape: bf16[32,32], index: 1, kind: input, shape index: {}]
  %s2 = inlined_call_operand.vmem [shape: f32[32,1], index: 2, kind: input, shape index: {}]
  %s3 = inlined_call_operand.vmem [shape: bf16[8,32], index: 3, kind: input, shape index: {}]
  %s4 = inlined_call_operand.vmem [shape: f32[8,1], index: 4, kind: input, shape index: {}]
  %s5 = inlined_call_operand.vmem [shape: s32[1,128], index: 5, kind: output, shape index: {}]
  %s6 = sld [smem:[#allocation0]]
  $region30: #{classifier_forward.1} parent=0
    _
  %s8 = ssub.s32 1, %s6
  %s9 = scalar_select 0, %s8, %s6
  // Predicated region
  $region2: #{classifier_forward.1} parent=0 // pred_check
    _
  $region3: #{classifier_forward.1} parent=0 // pred_check_branch
    %11 = sbr.rel (0) target = $region5
  $region4: #{classifier_forward.1} parent=0 // pred_region
    _
  $region5: #{classifier_forward.1} parent=0 // pred_fallthru
    _
  // Predicated region
  $region6: #{classifier_forward.1} parent=0 // pred_check
    _
  $region7: #{classifier_forward.1} parent=0 // pred_check_branch
    %13 = sbr.rel (0) target = $region9
  $region8: #{classifier_forward.1} parent=0 // pred_region
    _
  $region9: #{classifier_forward.1} parent=0 // pred_fallthru
    _
  // Predicated region
  $region10: #{classifier_forward.1} parent=0 // pred_check
    _
  $region11: #{classifier_forward.1} parent=0 // pred_check_branch
    %15 = sbr.rel (0) target = $region13
  $region12: #{classifier_forward.1} parent=0 // pred_region
    _
  $region13: #{classifier_forward.1} parent=0 // pred_fallthru
    _
  // Predicated region
  $region14: #{classifier_forward.1} parent=0 // pred_check
    _
  $region15: #{classifier_forward.1} parent=0 // pred_check_branch
    %17 = sbr.rel (0) target = $region17
  $region16: #{classifier_forward.1} parent=0 // pred_region
    _
  $region17: #{classifier_forward.1} parent=0 // pred_fallthru
    _
  // Predicated region
  $region18: #{classifier_forward.1} parent=0 // pred_check
    _
  $region19: #{classifier_forward.1} parent=0 // pred_check_branch
    %19 = sbr.rel (0) target = $region21
  $region20: #{classifier_forward.1} parent=0 // pred_region
    _
  $region21: #{classifier_forward.1} parent=0 // pred_fallthru
    _
  %v21 = vld [vmem:[%s0] sm:$0xff]
  %v22 = vld [vmem:[%s0 + $0x8] sm:$0xff]
  %v23 = vld [vmem:[%s0 + $0x10] sm:$0xff]
  %v24 = vld [vmem:[%s0 + $0x18] sm:$0xff]
  %v25 = vld [vmem:[%s0 + $0x20] sm:$0xff]
  %v26 = vld [vmem:[%s0 + $0x28] sm:$0xff]
  %v27 = vld [vmem:[%s0 + $0x30] sm:$0xff]
  %v28 = vld [vmem:[%s0 + $0x38] sm:$0xff]
  %v29 = vld [vmem:[%s0 + $0x40] sm:$0xff]
  %v30 = vld [vmem:[%s0 + $0x48] sm:$0xff]
  %v31 = vld [vmem:[%s0 + $0x50] sm:$0xff]
  %v32 = vld [vmem:[%s0 + $0x58] sm:$0xff]
  %v33 = vld [vmem:[%s0 + $0x60] sm:$0xff]
  %v34 = vld [vmem:[%s0 + $0x68] sm:$0xff]
  %v35 = vld [vmem:[%s0 + $0x70] sm:$0xff]
  %v36 = vld [vmem:[%s0 + $0x78] sm:$0xff]
  %v37 = vpack.c.bf16 %v22, %v21
  %v38 = vpack.c.bf16 %v24, %v23
  %v39 = vpack.c.bf16 %v26, %v25
  %v40 = vpack.c.bf16 %v28, %v27
  %v41 = vpack.c.bf16 %v30, %v29
  %v42 = vpack.c.bf16 %v32, %v31
  %v43 = vpack.c.bf16 %v34, %v33
  %v44 = vpack.c.bf16 %v36, %v35
  %v45 = vld [vmem:[%s1] sm:$0xf]
  %v46 = vld [vmem:[%s1 + $0x4] sm:$0xf]
  %v47 = vld [vmem:[%s1 + $0x8] sm:$0xf]
  %v48 = vld [vmem:[%s1 + $0xc] sm:$0xf]
  %v49 = vld [vmem:[%s2] sm:$0xff]
  %v50 = vld [vmem:[%s2 + $0x8] sm:$0xff]
  %v51 = vld [vmem:[%s2 + $0x10] sm:$0xff]
  %v52 = vld [vmem:[%s2 + $0x18] sm:$0xff]
  %54 = vset.pattern.permute.xlu0 0
  %55 = vperm.xlu0 %54, %v49
  %v56 = vpop.permute.xlu0 %55
  %59 = vset.pattern.permute.xlu0 0
  %60 = vperm.xlu0 %59, %v50
  %v61 = vpop.permute.xlu0 %60
  %64 = vset.pattern.permute.xlu0 0
  %65 = vperm.xlu0 %64, %v51
  %v66 = vpop.permute.xlu0 %65
  %69 = vset.pattern.permute.xlu0 0
  %70 = vperm.xlu0 %69, %v52
  %v71 = vpop.permute.xlu0 %70
  %v77 = vunpack.c.l.b16 %v45
  %v78 = vunpack.c.l.b16 %v46
  %v79 = vunpack.c.l.b16 %v47
  %v80 = vunpack.c.l.b16 %v48
  %v81 = vpack.c.b16 %v78, %v77
  %v82 = vpack.c.b16 %v80, %v79
  %vm83 = vcmask 261120
  %v85 = vsel %vm83, %v81, 0
  %v88 = vsel %vm83, %v82, 0
  %v91 = vsel %vm83, %v37, 0
  %v94 = vsel %vm83, %v38, 0
  %v97 = vsel %vm83, %v39, 0
  %v100 = vsel %vm83, %v40, 0
  %v103 = vsel %vm83, %v41, 0
  %v106 = vsel %vm83, %v42, 0
  %v109 = vsel %vm83, %v43, 0
  %v112 = vsel %vm83, %v44, 0
  %114 = vmatprep.subr.bf16.mxu0 0
  %115 = vmatpush1.bf16.xpose.msra.mxu0 %v112
  %116 = vmatprep.subr.bf16.mxu0 0
  %117 = vmatpush1.bf16.xpose.msra.mxu0 %v109
  %118 = vmatprep.subr.bf16.mxu0 0
  %119 = vmatpush1.bf16.xpose.msra.mxu0 %v106
  %120 = vmatprep.subr.bf16.mxu0 0
  %121 = vmatpush1.bf16.xpose.msra.mxu0 %v103
  %122 = vmatprep.subr.bf16.mxu0 0
  %123 = vmatpush1.bf16.xpose.msra.mxu0 %v100
  %124 = vmatprep.subr.bf16.mxu0 0
  %125 = vmatpush1.bf16.xpose.msra.mxu0 %v97
  %126 = vmatprep.subr.bf16.mxu0 0
  %127 = vmatpush1.bf16.xpose.msra.mxu0 %v94
  %128 = vmatprep.subr.bf16.mxu0 0
  %129 = vmatpush1.bf16.xpose.msra.mxu0 %v91
  %130 = vmatprep.subr.bf16.mxu0 0
  %131 = vmatpush2.bf16.xpose.msra.mxu0 0
  %132 = vmatprep.subr.bf16.mxu0 0
  %133 = vmatpush2.bf16.xpose.msra.mxu0 0
  %134 = vmatprep.subr.bf16.mxu0 0
  %135 = vmatpush2.bf16.xpose.msra.mxu0 0
  %136 = vmatprep.subr.bf16.mxu0 0
  %137 = vmatpush2.bf16.xpose.msra.mxu0 0
  %138 = vmatprep.subr.bf16.mxu0 0
  %139 = vmatpush2.bf16.xpose.msra.mxu0 0
  %140 = vmatprep.subr.bf16.mxu0 0
  %141 = vmatpush2.bf16.xpose.msra.mxu0 0
  %142 = vmatprep.subr.bf16.mxu0 0
  %143 = vmatpush2.bf16.xpose.msra.mxu0 0
  %144 = vmatprep.subr.bf16.mxu0 0
  %145 = vmatpush2.bf16.xpose.msra.mxu0 0
  %146 = vmatprep.mubr.bf16.mxu0 0
  %147 = vmatmul.mubr.bf16.gmra.mxu0 %v85
  %v148 = vpop.f32.mrf.mxu0
  %v149 = vadd.f32 %v56, %v148
  %v150 = vpop.f32.mrf.mxu0
  %v151 = vpop.f32.mrf.mxu0
  %v152 = vadd.f32 %v61, %v151
  %v153 = vpop.f32.mrf.mxu0
  %154 = vmatprep.mubr.bf16.mxu0 0
  %155 = vmatmul.mubr.bf16.gmra.mxu0 %v88
  %v156 = vpop.f32.mrf.mxu0
  %v157 = vadd.f32 %v66, %v156
  %v158 = vpop.f32.mrf.mxu0
  %v159 = vpop.f32.mrf.mxu0
  %v160 = vadd.f32 %v71, %v159
  %v161 = vpop.f32.mrf.mxu0
  %162 = vdwg.mxu0
  %v163 = vmax.f32 %v149, 0.0
  %v164 = vmax.f32 %v152, 0.0
  %v165 = vmax.f32 %v157, 0.0
  %v166 = vmax.f32 %v160, 0.0
  %v167 = vld [vmem:[%s3] sm:$0xf]
  %v168 = vpack.c.bf16 %v164, %v163
  %v169 = vpack.c.bf16 %v166, %v165
  %v170 = vld [vmem:[%s4] sm:$0xff]
  %172 = vset.pattern.permute.xlu0 0
  %173 = vperm.xlu0 %172, %v170
  %v174 = vpop.permute.xlu0 %173
  %v177 = vsel %vm83, %v167, 0
  %179 = vmatprep.subr.bf16.mxu0 0
  %180 = vmatpush1.bf16.msra.mxu0 0
  %181 = vmatprep.subr.bf16.mxu0 0
  %182 = vmatpush1.bf16.msra.mxu0 0
  %183 = vmatprep.subr.bf16.mxu0 0
  %184 = vmatpush1.bf16.msra.mxu0 0
  %185 = vmatprep.subr.bf16.mxu0 0
  %186 = vmatpush1.bf16.msra.mxu0 0
  %187 = vmatprep.subr.bf16.mxu0 0
  %188 = vmatpush1.bf16.msra.mxu0 0
  %189 = vmatprep.subr.bf16.mxu0 0
  %190 = vmatpush1.bf16.msra.mxu0 0
  %191 = vmatprep.subr.bf16.mxu0 0
  %192 = vmatpush1.bf16.msra.mxu0 %v169
  %193 = vmatprep.subr.bf16.mxu0 0
  %194 = vmatpush1.bf16.msra.mxu0 %v168
  %195 = vmatprep.subr.bf16.mxu0 0
  %196 = vmatpush2.bf16.msra.mxu0 0
  %197 = vmatprep.subr.bf16.mxu0 0
  %198 = vmatpush2.bf16.msra.mxu0 0
  %199 = vmatprep.subr.bf16.mxu0 0
  %200 = vmatpush2.bf16.msra.mxu0 0
  %201 = vmatprep.subr.bf16.mxu0 0
  %202 = vmatpush2.bf16.msra.mxu0 0
  %203 = vmatprep.subr.bf16.mxu0 0
  %204 = vmatpush2.bf16.msra.mxu0 0
  %205 = vmatprep.subr.bf16.mxu0 0
  %206 = vmatpush2.bf16.msra.mxu0 0
  %207 = vmatprep.subr.bf16.mxu0 0
  %208 = vmatpush2.bf16.msra.mxu0 0
  %209 = vmatprep.subr.bf16.mxu0 0
  %210 = vmatpush2.bf16.msra.mxu0 0
  %211 = vmatprep.mubr.bf16.mxu0 0
  %212 = vmatmul.mubr.bf16.gmra.mxu0 %v177
  %v213 = vpop.f32.mrf.mxu0
  %v214 = vadd.f32 %v174, %v213
  %v215 = vpop.f32.mrf.mxu0
  %v216 = vpop.f32.mrf.mxu0
  %v217 = vpop.f32.mrf.mxu0
  %218 = vdwg.mxu0
  %v219 = vrot.slane %v214, 4
  %v220 = vmax.f32 %v214, %v219
  %v221 = vrot.slane %v220, 2
  %v222 = vmax.f32 %v220, %v221
  %v223 = vrot.slane %v222, 1
  %v224 = vmax.f32 %v222, %v223
  %v225 = vlaneseq
  %v226 = vshrl.u32 %v225, 7
  %vm227 = vcmp.eq.f32.partialorder %v214, %v224
  %v228 = vsel %vm227, %v226, 8
  %v229 = vrot.slane %v228, 4
  %vm230 = vcmp.lt.s32.totalorder %v228, %v229
  %v231 = vsel %vm230, %v228, %v229
  %v232 = vrot.slane %v231, 2
  %vm233 = vcmp.lt.s32.totalorder %v231, %v232
  %v234 = vsel %vm233, %v231, %v232
  %v235 = vrot.slane %v234, 1
  %vm236 = vcmp.lt.s32.totalorder %v234, %v235
  %v237 = vsel %vm236, %v234, %v235
  %238 = vst [vmem:[%s5] sm:$0x1] %v237
  // Predicated region
  $region22: #{classifier_forward.1} parent=0 // pred_check
    _
  $region23: #{classifier_forward.1} parent=0 // pred_check_branch
    %240 = sbr.rel (0) target = $region25
  $region24: #{classifier_forward.1} parent=0 // pred_region
    _
  $region25: #{classifier_forward.1} parent=0 // pred_fallthru
    _
  // Predicated region
  $region26: #{classifier_forward.1} parent=0 // pred_check
    _
  $region27: #{classifier_forward.1} parent=0 // pred_check_branch
    %242 = sbr.rel (0) target = $region29
  $region28: #{classifier_forward.1} parent=0 // pred_region
    _
  $region29: #{classifier_forward.1} parent=0 // pred_fallthru
    _

</llo_original>
